<compile_context>
chip_gen: v5e
topology: v5e:2x2
jax: 0.10.0
libtpu: 0.0.40
codegen_flags: <defaults>
</compile_context>

<pallas_src>
import functools

import jax
import jax.numpy as jnp
from jax.experimental import pallas as pl
from jax.experimental.pallas import tpu as pltpu

LANE = 128
MAX_TILE_ROWS = 2048      # f32: 2048 x 128 x 4 B = 1 MiB per input per buffer


def _round_up(x, m):
    return ((x + m - 1) // m) * m


def _sublane_multiple(dtype):
    # Sub-32-bit dtypes pack along sublanes: f32 -> 8, bf16/f16 -> 16, i8/fp8 -> 32.
    return max(8, 32 // jnp.dtype(dtype).itemsize)


def _num_row_splits():
    """2 row-splits on v7x (2 TensorCores / chip), 1 on v5e / v6e (single TC)."""
    try:
        kind = jax.devices()[0].device_kind.lower()
    except Exception:
        return 1
    if "7x" in kind or "v7" in kind:
        return 2
    return 1


NSPLIT = _num_row_splits()


def _dice_sums_kernel(yt_ref, yp_ref, ij_ref, inter_ref, acc_ij, acc_int, *,
                      rows, tile_rows, blocks_per_split, needs_mask):
    """Per-split partial sums of (y_true + y_pred) and y_true * y_pred."""
    r = pl.program_id(1)

    @pl.when(r == 0)
    def _():
        acc_ij[...] = jnp.zeros_like(acc_ij)
        acc_int[...] = jnp.zeros_like(acc_int)

    yt = yt_ref[...].astype(jnp.float32)
    yp = yp_ref[...].astype(jnp.float32)

    def accumulate(yt, yp):
        # Reduce the (tile_rows, 128) block to a single (8, 128) vreg with pure
        # vreg-wise VPU adds, then accumulate into the tiny VMEM scratch.
        acc_ij[...] += jnp.sum((yt + yp).reshape(-1, 8, LANE), axis=0)
        acc_int[...] += jnp.sum((yt * yp).reshape(-1, 8, LANE), axis=0)

    if needs_mask:
        # Unclamped logical block index: the partial tail block (and any clamped
        # duplicate block from an uneven core split) contains garbage rows that
        # must be zeroed.  Only that block pays for the mask; fully-valid blocks
        # take the unmasked fast path.
        block = pl.program_id(0) * blocks_per_split + r
        valid = rows - block * tile_rows

        @pl.when(valid >= tile_rows)
        def _():
            accumulate(yt, yp)

        @pl.when(valid < tile_rows)
        def _():
            row_ids = jax.lax.broadcasted_iota(jnp.int32, (tile_rows, LANE), 0)
            keep = row_ids < valid
            accumulate(jnp.where(keep, yt, 0.0), jnp.where(keep, yp, 0.0))
    else:
        accumulate(yt, yp)

    @pl.when(r == pl.num_programs(1) - 1)
    def _():
        ij_ref[0, 0] = jnp.sum(acc_ij[...])
        inter_ref[0, 0] = jnp.sum(acc_int[...])


def _dice_partial_sums(yt2d, yp2d, rows, mult):
    """Run the Pallas kernel on a lane-dense (rows, 128) slab.

    Returns (sum(y_true) + sum(y_pred), sum(y_true * y_pred)) as f32 scalars.
    """
    tile_rows = min(MAX_TILE_ROWS, _round_up(pl.cdiv(rows, NSPLIT), mult))
    if tile_rows > rows:
        # Keep every block's start row in-bounds; the last block may still be a
        # (masked) partial block at the array end.
        tile_rows = (rows // mult) * mult

    num_blocks = pl.cdiv(rows, tile_rows)
    blocks_per_split = pl.cdiv(num_blocks, NSPLIT)
    # Clamp only when the core split is uneven (duplicate trailing blocks).
    needs_clamp = NSPLIT * blocks_per_split != num_blocks
    # Mask only when some block is partially or fully past the valid rows.
    needs_mask = (NSPLIT * blocks_per_split * tile_rows) != rows

    def in_index(s, r):
        b = s * blocks_per_split + r
        if needs_clamp:
            b = jnp.minimum(b, num_blocks - 1)
        return (b, 0)

    kernel = functools.partial(
        _dice_sums_kernel,
        rows=rows, tile_rows=tile_rows,
        blocks_per_split=blocks_per_split, needs_mask=needs_mask)

    part_shape = jax.ShapeDtypeStruct((NSPLIT, 1), jnp.float32)
    part_spec = pl.BlockSpec((1, 1), lambda s, r: (s, 0),
                             memory_space=pltpu.SMEM)

    ij_s, inter_s = pl.pallas_call(
        kernel,
        out_shape=(part_shape, part_shape),
        grid_spec=pltpu.PrefetchScalarGridSpec(
            num_scalar_prefetch=0,
            grid=(NSPLIT, blocks_per_split),
            in_specs=[
                pl.BlockSpec((tile_rows, LANE), in_index),
                pl.BlockSpec((tile_rows, LANE), in_index),
            ],
            out_specs=(part_spec, part_spec),
            scratch_shapes=[
                pltpu.VMEM((8, LANE), jnp.float32),
                pltpu.VMEM((8, LANE), jnp.float32),
            ],
        ),
        compiler_params=pltpu.CompilerParams(
            dimension_semantics=(
                (pltpu.CORE_PARALLEL if NSPLIT > 1 else pltpu.ARBITRARY),
                pltpu.ARBITRARY),
            vmem_limit_bytes=32 * 1024 * 1024),
    )(yt2d, yp2d)

    # Tiny combine of per-split partials (a few scalar ops in XLA).
    return jnp.sum(ij_s), jnp.sum(inter_s)


@jax.jit
def soft_dice_loss(y_pred, y_true):
    """Pallas implementation of SoftDiceLoss.forward(y_pred, y_true)."""
    assert y_pred.shape == y_true.shape

    smooth = jnp.float32(1.0)

    yp = jnp.ravel(y_pred)
    yt = jnp.ravel(y_true)
    n = yp.shape[0]

    mult = max(_sublane_multiple(y_pred.dtype), _sublane_multiple(y_true.dtype))

    n_main = (n // LANE) * LANE          # lane-aligned prefix handled in-kernel
    rows = n_main // LANE

    if rows >= mult:
        yt2d = yt[:n_main].reshape(rows, LANE)
        yp2d = yp[:n_main].reshape(rows, LANE)
        ij, inter = _dice_partial_sums(yt2d, yp2d, rows, mult)
        tail_start = n_main
    else:
        # Tiny input: a full (sublane x lane) tile is not even filled -> XLA only.
        ij = jnp.float32(0.0)
        inter = jnp.float32(0.0)
        tail_start = 0

    if tail_start < n:
        # Ragged tail (< 128 elements, or the whole tiny input): tiny XLA
        # reduction instead of a full-array pad copy.
        yt_tail = yt[tail_start:].astype(jnp.float32)
        yp_tail = yp[tail_start:].astype(jnp.float32)
        ij = ij + jnp.sum(yt_tail) + jnp.sum(yp_tail)
        inter = inter + jnp.sum(yt_tail * yp_tail)

    score = (2.0 * inter + smooth) / (ij + smooth)
    loss = 1.0 - score                   # score is scalar -> .mean() is identity
    return loss                          # f32 (accumulation precision)


if __name__ == "__main__":
    key = jax.random.PRNGKey(0)
    k1, k2, k3, k4, k5, k6 = jax.random.split(key, 6)

    def ref_loss(y_pred, y_true):
        ypf = jnp.ravel(y_pred).astype(jnp.float32)
        ytf = jnp.ravel(y_true).astype(jnp.float32)
        i = jnp.sum(ytf)
        j = jnp.sum(ypf)
        inter = jnp.sum(ytf * ypf)
        return 1.0 - (2.0 * inter + 1.0) / (i + j + 1.0)

    # 1) Main case: small NCHW shapes consistent with a segmentation loss.
    y_pred = jax.nn.sigmoid(jax.random.normal(k1, (2, 4, 16, 16), dtype=jnp.float32))
    y_true = (jax.random.uniform(k2, (2, 4, 16, 16)) > 0.5).astype(jnp.float32)
    loss = jax.block_until_ready(soft_dice_loss(y_pred, y_true))
    assert jnp.allclose(loss, ref_loss(y_pred, y_true), rtol=1e-5, atol=1e-5), loss

    # 2) Ragged case: numel % 128 != 0 -> kernel on the aligned prefix (with a
    #    masked partial last block) + XLA tail.
    y_pred_r = jax.nn.sigmoid(jax.random.normal(k3, (4, 331), dtype=jnp.float32))
    y_true_r = (jax.random.uniform(k4, (4, 331)) > 0.5).astype(jnp.float32)
    loss_r = jax.block_until_ready(soft_dice_loss(y_pred_r, y_true_r))
    assert jnp.allclose(loss_r, ref_loss(y_pred_r, y_true_r), rtol=1e-5, atol=1e-5), loss_r

    # 3) Tiny case (< one tile): handled entirely by the XLA fallback path.
    y_pred_t = jax.nn.sigmoid(jax.random.normal(k5, (3, 5, 7), dtype=jnp.float32))
    y_true_t = (jax.random.uniform(k6, (3, 5, 7)) > 0.5).astype(jnp.float32)
    loss_t = jax.block_until_ready(soft_dice_loss(y_pred_t, y_true_t))
    assert jnp.allclose(loss_t, ref_loss(y_pred_t, y_true_t), rtol=1e-5, atol=1e-5), loss_t

    # 4) bf16 case: dtype-aware sublane rounding (16) and in-kernel f32 cast.
    y_pred_b = y_pred.astype(jnp.bfloat16)
    y_true_b = y_true.astype(jnp.bfloat16)
    loss_b = jax.block_until_ready(soft_dice_loss(y_pred_b, y_true_b))
    assert jnp.allclose(loss_b, ref_loss(y_pred_b, y_true_b), rtol=1e-5, atol=1e-5), loss_b

    print("KERNEL_OK")
</pallas_src>

<mosaic_0001>
module attributes {stable_mosaic.version = 11 : i64} {
  func.func @_dice_sums_kernel(%arg0: i32, %arg1: i32, %arg2: memref<16x128xf32, #tpu.memory_space<vmem>>, %arg3: memref<16x128xf32, #tpu.memory_space<vmem>>, %arg4: memref<1x1xf32, #tpu.memory_space<smem>>, %arg5: memref<1x1xf32, #tpu.memory_space<smem>>, %arg6: memref<8x128xf32, #tpu.memory_space<vmem>>, %arg7: memref<8x128xf32, #tpu.memory_space<vmem>>) attributes {dimension_semantics = [#tpu.dimension_semantics<arbitrary>, #tpu.dimension_semantics<arbitrary>], iteration_bounds = array<i64: 1, 1>, scalar_prefetch = 0 : i64, scratch_operands = 2 : i64, tpu.core_type = #tpu.core_type<tc>, window_params = [{transform_indices = @transform_0, window_bounds = array<i64: 16, 128>}, {transform_indices = @transform_1, window_bounds = array<i64: 16, 128>}, {transform_indices = @transform_2, window_bounds = array<i64: 1, 1>}, {transform_indices = @transform_3, window_bounds = array<i64: 1, 1>}]} {
    %c0_i32 = arith.constant 0 : i32
    %0 = arith.cmpi eq, %arg1, %c0_i32 : i32
    %1 = arith.extui %0 : i1 to i32
    %c0_i32_0 = arith.constant 0 : i32
    %2 = arith.cmpi ne, %1, %c0_i32_0 : i32
    scf.if %2 {
      %cst_15 = arith.constant 0.000000e+00 : f32
      %20 = vector.broadcast %cst_15 : f32 to vector<8x128xf32>
      %c0_16 = arith.constant 0 : index
      %c0_17 = arith.constant 0 : index
      %21 = vector.load %arg6[%c0_16, %c0_17] : memref<8x128xf32, #tpu.memory_space<vmem>>, vector<8x128xf32>
      tpu.vector_store %arg6[%c0_16, %c0_17], %20 {strides = array<i32>} : memref<8x128xf32, #tpu.memory_space<vmem>>, vector<8x128xf32>,
      %cst_18 = arith.constant 0.000000e+00 : f32
      %22 = vector.broadcast %cst_18 : f32 to vector<8x128xf32>
      %c0_19 = arith.constant 0 : index
      %c0_20 = arith.constant 0 : index
      %23 = vector.load %arg7[%c0_19, %c0_20] : memref<8x128xf32, #tpu.memory_space<vmem>>, vector<8x128xf32>
      tpu.vector_store %arg7[%c0_19, %c0_20], %22 {strides = array<i32>} : memref<8x128xf32, #tpu.memory_space<vmem>>, vector<8x128xf32>,
    } else {
    }
    %c0 = arith.constant 0 : index
    %c0_1 = arith.constant 0 : index
    %3 = vector.load %arg2[%c0, %c0_1] : memref<16x128xf32, #tpu.memory_space<vmem>>, vector<16x128xf32>
    %c0_2 = arith.constant 0 : index
    %c0_3 = arith.constant 0 : index
    %4 = vector.load %arg3[%c0_2, %c0_3] : memref<16x128xf32, #tpu.memory_space<vmem>>, vector<16x128xf32>
    %c0_4 = arith.constant 0 : index
    %c0_5 = arith.constant 0 : index
    %5 = vector.load %arg6[%c0_4, %c0_5] : memref<8x128xf32, #tpu.memory_space<vmem>>, vector<8x128xf32>
    %6 = arith.addf %3, %4 : vector<16x128xf32>
    %7 = vector.shape_cast %6 : vector<16x128xf32> to vector<2x8x128xf32>
    %cst = arith.constant dense<0.000000e+00> : vector<8x128xf32>
    %8 = vector.multi_reduction <add>, %7, %cst [0] : vector<2x8x128xf32> to vector<8x128xf32>
    %9 = arith.addf %5, %8 : vector<8x128xf32>
    %c0_6 = arith.constant 0 : index
    %c0_7 = arith.constant 0 : index
    %10 = vector.load %arg6[%c0_6, %c0_7] : memref<8x128xf32, #tpu.memory_space<vmem>>, vector<8x128xf32>
    tpu.vector_store %arg6[%c0_6, %c0_7], %9 {strides = array<i32>} : memref<8x128xf32, #tpu.memory_space<vmem>>, vector<8x128xf32>,
    %c0_8 = arith.constant 0 : index
    %c0_9 = arith.constant 0 : index
    %11 = vector.load %arg7[%c0_8, %c0_9] : memref<8x128xf32, #tpu.memory_space<vmem>>, vector<8x128xf32>
    %12 = arith.mulf %3, %4 : vector<16x128xf32>
    %13 = vector.shape_cast %12 : vector<16x128xf32> to vector<2x8x128xf32>
    %cst_10 = arith.constant dense<0.000000e+00> : vector<8x128xf32>
    %14 = vector.multi_reduction <add>, %13, %cst_10 [0] : vector<2x8x128xf32> to vector<8x128xf32>
    %15 = arith.addf %11, %14 : vector<8x128xf32>
    %c0_11 = arith.constant 0 : index
    %c0_12 = arith.constant 0 : index
    %16 = vector.load %arg7[%c0_11, %c0_12] : memref<8x128xf32, #tpu.memory_space<vmem>>, vector<8x128xf32>
    tpu.vector_store %arg7[%c0_11, %c0_12], %15 {strides = array<i32>} : memref<8x128xf32, #tpu.memory_space<vmem>>, vector<8x128xf32>,
    %c0_i32_13 = arith.constant 0 : i32
    %17 = arith.cmpi eq, %arg1, %c0_i32_13 : i32
    %18 = arith.extui %17 : i1 to i32
    %c0_i32_14 = arith.constant 0 : i32
    %19 = arith.cmpi ne, %18, %c0_i32_14 : i32
    scf.if %19 {
      %c0_15 = arith.constant 0 : index
      %c0_16 = arith.constant 0 : index
      %20 = vector.load %arg6[%c0_15, %c0_16] : memref<8x128xf32, #tpu.memory_space<vmem>>, vector<8x128xf32>
      %21 = vector.shape_cast %20 : vector<8x128xf32> to vector<1x8x128xf32>
      %cst_17 = arith.constant dense<0.000000e+00> : vector<1xf32>
      %22 = vector.multi_reduction <add>, %21, %cst_17 [1, 2] : vector<1x8x128xf32> to vector<1xf32>
      %23 = vector.shape_cast %22 : vector<1xf32> to vector<1x1x1xf32>
      %24 = vector.extract %23[0, 0, 0] : f32 from vector<1x1x1xf32>
      %c0_18 = arith.constant 0 : index
      %c0_19 = arith.constant 0 : index
      %25 = memref.load %arg4[%c0_18, %c0_19] : memref<1x1xf32, #tpu.memory_space<smem>>
      memref.store %24, %arg4[%c0_18, %c0_19] : memref<1x1xf32, #tpu.memory_space<smem>>
      %c0_20 = arith.constant 0 : index
      %c0_21 = arith.constant 0 : index
      %26 = vector.load %arg7[%c0_20, %c0_21] : memref<8x128xf32, #tpu.memory_space<vmem>>, vector<8x128xf32>
      %27 = vector.shape_cast %26 : vector<8x128xf32> to vector<1x8x128xf32>
      %cst_22 = arith.constant dense<0.000000e+00> : vector<1xf32>
      %28 = vector.multi_reduction <add>, %27, %cst_22 [1, 2] : vector<1x8x128xf32> to vector<1xf32>
      %29 = vector.shape_cast %28 : vector<1xf32> to vector<1x1x1xf32>
      %30 = vector.extract %29[0, 0, 0] : f32 from vector<1x1x1xf32>
      %c0_23 = arith.constant 0 : index
      %c0_24 = arith.constant 0 : index
      %31 = memref.load %arg5[%c0_23, %c0_24] : memref<1x1xf32, #tpu.memory_space<smem>>
      memref.store %30, %arg5[%c0_23, %c0_24] : memref<1x1xf32, #tpu.memory_space<smem>>
    } else {
    }
    return
  }
  func.func @transform_0(%arg0: i32, %arg1: i32) -> (i32, i32) {
    %c1_i32 = arith.constant 1 : i32
    %0 = arith.muli %arg0, %c1_i32 : i32
    %1 = arith.addi %0, %arg1 : i32
    %c0_i32 = arith.constant 0 : i32
    %c0_i32_0 = arith.constant 0 : i32
    return %1, %c0_i32 : i32, i32
  }
  func.func @transform_1(%arg0: i32, %arg1: i32) -> (i32, i32) {
    %c1_i32 = arith.constant 1 : i32
    %0 = arith.muli %arg0, %c1_i32 : i32
    %1 = arith.addi %0, %arg1 : i32
    %c0_i32 = arith.constant 0 : i32
    %c0_i32_0 = arith.constant 0 : i32
    return %1, %c0_i32 : i32, i32
  }
  func.func @transform_2(%arg0: i32, %arg1: i32) -> (i32, i32) {
    %c0_i32 = arith.constant 0 : i32
    %c0_i32_0 = arith.constant 0 : i32
    return %arg0, %c0_i32 : i32, i32
  }
  func.func @transform_3(%arg0: i32, %arg1: i32) -> (i32, i32) {
    %c0_i32 = arith.constant 0 : i32
    %c0_i32_0 = arith.constant 0 : i32
    return %arg0, %c0_i32 : i32, i32
  }
}

</mosaic_0001>

<llo_original>
// kernel: soft_dice_loss.1
$region0: #{soft_dice_loss.1}
  #allocation0 [shape = 'u32[]', space=smem, size = 0x4, offset = 0x4, fixed_abs, tag = 'smem constant byte address 0x4 - core index']
  #allocation1 [shape = 'u32[72,128]{1,0:T(1,128)}', space=vmem, size = 0x9000, scoped, tag = 'internal scratch']
  #allocation2 [shape = 'f32[8,128]{1,0:T(8,128)}', space=vmem, size = 0x1000, scoped, tag = 'scratch operand']
  #allocation3 [shape = 'f32[8,128]{1,0:T(8,128)}', space=vmem, size = 0x1000, scoped, tag = 'scratch operand']
  %s0 = inlined_call_operand.vmem [shape: f32[16,128], index: 0, kind: input, shape index: {}]
  %s1 = inlined_call_operand.vmem [shape: f32[16,128], index: 1, kind: input, shape index: {}]
  %s2 = inlined_call_operand.hbm [shape: f32[1,1], index: 2, kind: output, shape index: {0}]
  %s3 = inlined_call_operand.hbm [shape: f32[1,1], index: 3, kind: output, shape index: {1}]
  %4 = xla_tuple %s2, %s3
  %s5 = sld [smem:[#allocation0]]
  $region34: #{soft_dice_loss.1} parent=0
    _
  %s7 = ssub.s32 1, %s5
  %s8 = scalar_select 0, %s7, %s5
  $region1: #{soft_dice_loss.1} parent=0
    #allocation4 [shape = 'u8[512]{0}', space=smem, size = 0x200, scoped, tag = 'output window, operand 0, single buffered']
    #allocation5 [shape = 's32[1]{0}', space=sflag, size = 0x4, scoped, tag = 'scoped memory for soft_dice_loss.1']
    #allocation6 [shape = 'u8[512]{0}', space=smem, size = 0x200, scoped, tag = 'output window, operand 1, single buffered']
    #allocation7 [shape = 's32[1]{0}', space=sflag, size = 0x4, scoped, tag = 'scoped memory for soft_dice_loss.1']
    %9 = vsyncpa [#allocation5], 0
    %10 = vsyncpa [#allocation7], 0
    // Predicated region
    $region2: #{soft_dice_loss.1} parent=1 // pred_check
      _
    $region3: #{soft_dice_loss.1} parent=1 // pred_check_branch
      %12 = sbr.rel (0) target = $region5
    $region4: #{soft_dice_loss.1} parent=1 // pred_region
      %s13 = sadd.s32 0, 0
      %s14 = smul.u32 2, %s13
      %p15 = scmp.lt.s32.totalorder %s14, 1
      %s16 = scalar_select %p15, %s14, 1
      %s17 = smul.addr %s16, 8
      %s18 = scalar_lea.vmem %s0, %s17
      %s19 = sadd.s32 0, 0
      %s20 = smul.u32 2, %s19
    $region5: #{soft_dice_loss.1} parent=1 // pred_fallthru
      _
    // Predicated region
    $region6: #{soft_dice_loss.1} parent=1 // pred_check
      _
    $region7: #{soft_dice_loss.1} parent=1 // pred_check_branch
      %22 = sbr.rel (0) target = $region9
    $region8: #{soft_dice_loss.1} parent=1 // pred_region
      %s23 = sadd.s32 0, 0
      %s24 = smul.u32 2, %s23
      %p25 = scmp.lt.s32.totalorder %s24, 1
      %s26 = scalar_select %p25, %s24, 1
      %s27 = smul.addr %s26, 8
      %s28 = scalar_lea.vmem %s1, %s27
      %s29 = sadd.s32 0, 0
      %s30 = smul.u32 2, %s29
    $region9: #{soft_dice_loss.1} parent=1 // pred_fallthru
      _
    %s31 = sadd.s32 0, 0
    %s32 = smul.u32 2, %s31
    %p33 = scmp.lt.s32.totalorder %s32, 1
    %s34 = scalar_select %p33, %s32, 1
    %s35 = smul.addr %s34, 8
    %s36 = scalar_lea.vmem %s0, %s35
    %s37 = sadd.s32 0, 0
    %s38 = smul.u32 2, %s37
    %p39 = scmp.lt.s32.totalorder %s38, 1
    %s40 = scalar_select %p39, %s38, 1
    %s41 = smul.addr %s40, 8
    %s42 = scalar_lea.vmem %s1, %s41
    %s43 = sadd.s32 0, 0
    %s44 = smul.u32 2, %s43
    %p45 = scmp.lt.s32.totalorder %s44, 1
    %s46 = scalar_select %p45, %s44, 1
    %s47 = smul.addr %s46, 8
    %s48 = scalar_lea.vmem %s0, %s47
    %s49 = sadd.s32 0, 0
    %s50 = smul.u32 2, %s49
    %s51 = sadd.s32 0, 0
    %s52 = smul.u32 2, %s51
    %p53 = scmp.lt.s32.totalorder %s52, 1
    %s54 = scalar_select %p53, %s52, 1
    %s55 = smul.addr %s54, 8
    %s56 = scalar_lea.vmem %s1, %s55
    %s57 = sadd.s32 0, 0
    %s58 = smul.u32 2, %s57
    %p59 = scmp.eq.s32.totalorder 0, 0
    // Predicated region
    $region10: #{soft_dice_loss.1} parent=1 // pred_check
      %p60 = pneg %p59
    $region11: #{soft_dice_loss.1} parent=1 // pred_check_branch
      %62 = sbr.rel (%p60) target = $region13
    $region12: #{soft_dice_loss.1} parent=1 // pred_region
      %63 = vst [vmem:[#allocation2] sm:$0xff] 0.0
      %64 = vst [vmem:[#allocation3] sm:$0xff] 0.0
    $region13: #{soft_dice_loss.1} parent=1 // pred_fallthru
      _
    %v65 = vld [vmem:[%s48] sm:$0xff]
    %v66 = vld [vmem:[%s48 + $0x8] sm:$0xff]
    %v67 = vld [vmem:[%s56] sm:$0xff]
    %v68 = vld [vmem:[%s56 + $0x8] sm:$0xff]
    %v69 = vld [vmem:[#allocation2] sm:$0xff]
    %v70 = vadd.f32 %v65, %v67
    %v71 = vadd.f32 %v66, %v68
    %v72 = vadd.f32 %v70, %v71
    %v73 = vadd.f32 %v69, %v72
    %74 = vst [vmem:[#allocation2] sm:$0xff] %v73
    %v75 = vld [vmem:[#allocation3] sm:$0xff]
    %v76 = vmul.f32 %v65, %v67
    %v77 = vmul.f32 %v66, %v68
    %v78 = vadd.f32 %v76, %v77
    %v79 = vadd.f32 %v75, %v78
    %80 = vst [vmem:[#allocation3] sm:$0xff] %v79
    // Predicated region
    $region14: #{soft_dice_loss.1} parent=1 // pred_check
      %p81 = pneg %p59
    $region15: #{soft_dice_loss.1} parent=1 // pred_check_branch
      %83 = sbr.rel (%p81) target = $region17
    $region16: #{soft_dice_loss.1} parent=1 // pred_region
      %v84 = vld [vmem:[#allocation2] sm:$0xff]
      %85 = vadd.xlane.f32.xlu0 %v84
      %v86 = vpop.xlane.xlu0 %85
      %v87 = vrot.slane %v86, 4
      %v88 = vadd.f32 %v86, %v87
      %v89 = vrot.slane %v88, 2
      %v90 = vadd.f32 %v88, %v89
      %v91 = vrot.slane %v90, 1
      %v92 = vadd.f32 %v90, %v91
      %s93 = vtos %v92
      %s94 = scalar_lea.smem [#allocation4], 0
      %95 = sst [smem:[%s94]] %s93
      %v96 = vld [vmem:[#allocation3] sm:$0xff]
      %97 = vadd.xlane.f32.xlu0 %v96
      %v98 = vpop.xlane.xlu0 %97
      %v99 = vrot.slane %v98, 4
      %v100 = vadd.f32 %v98, %v99
      %v101 = vrot.slane %v100, 2
      %v102 = vadd.f32 %v100, %v101
      %v103 = vrot.slane %v102, 1
      %v104 = vadd.f32 %v102, %v103
      %s105 = vtos %v104
      %s106 = scalar_lea.smem [#allocation6], 0
      %107 = sst [smem:[%s106]] %s105
    $region17: #{soft_dice_loss.1} parent=1 // pred_fallthru
      _
    // Predicated region
    $region18: #{soft_dice_loss.1} parent=1 // pred_check
      _
    $region19: #{soft_dice_loss.1} parent=1 // pred_check_branch
      %109 = sbr.rel (0) target = $region21
    $region20: #{soft_dice_loss.1} parent=1 // pred_region
      %111 = vsyncadd [#allocation5], 0
      %s113 = sshll.u32 %s2, 4
      %s114 = int_to_ptr.hbm [resolvable:$true] %s113
      %116 = dma.smem_to_hbm [#allocation4], 16, %s114, [#allocation5]
    $region21: #{soft_dice_loss.1} parent=1 // pred_fallthru
      _
    // Predicated region
    $region22: #{soft_dice_loss.1} parent=1 // pred_check
      _
    $region23: #{soft_dice_loss.1} parent=1 // pred_check_branch
      %118 = sbr.rel (0) target = $region25
    $region24: #{soft_dice_loss.1} parent=1 // pred_region
      %120 = vsyncadd [#allocation7], 0
      %s122 = sshll.u32 %s3, 4
      %s123 = int_to_ptr.hbm [resolvable:$true] %s122
      %125 = dma.smem_to_hbm [#allocation6], 16, %s123, [#allocation7]
    $region25: #{soft_dice_loss.1} parent=1 // pred_fallthru
      _
    // Predicated region
    $region26: #{soft_dice_loss.1} parent=1 // pred_check
      _
    $region27: #{soft_dice_loss.1} parent=1 // pred_check_branch
      %127 = sbr.rel (0) target = $region29
    $region28: #{soft_dice_loss.1} parent=1 // pred_region
      %129 = dma.done [#allocation5], 16
    $region29: #{soft_dice_loss.1} parent=1 // pred_fallthru
      _
    // Predicated region
    $region30: #{soft_dice_loss.1} parent=1 // pred_check
      _
    $region31: #{soft_dice_loss.1} parent=1 // pred_check_branch
      %131 = sbr.rel (0) target = $region33
    $region32: #{soft_dice_loss.1} parent=1 // pred_region
      %133 = dma.done [#allocation7], 16
    $region33: #{soft_dice_loss.1} parent=1 // pred_fallthru
      _
    %134 = sfence
    %135 = vsyncpa [#allocation5], 1
    %136 = vsyncpa [#allocation7], 1

</llo_original>
